<compile_context>
chip_gen: v5e
topology: v5e:2x2
jax: 0.10.0
libtpu: 0.0.40
codegen_flags: <defaults>
</compile_context>

<pallas_src>
import jax
import jax.numpy as jnp
from jax.experimental import pallas as pl
from jax.experimental.pallas import tpu as pltpu

LN_EPS = 1e-5  # nn.LayerNorm default


def _layernorm(x, gamma, beta):
    mu = jnp.mean(x, axis=-1, keepdims=True)
    xc = x - mu
    var = jnp.mean(xc * xc, axis=-1, keepdims=True)
    return xc * jax.lax.rsqrt(var + LN_EPS) * gamma + beta


def critic_kernel(state_ref, action_ref,
                  w1_ref, ln1_ref,
                  w2_ref, ln2_ref,
                  wa_ref, wq_ref, bq_ref,
                  out_ref):
    # Inputs are already f32 -> no redundant casts (perf feedback).
    state = state_ref[...]      # (TB, input_dims)
    action = action_ref[...]    # (TB, n_actions)

    # Unpack the packed per-feature rows (static sublane slices, zero-cost).
    b1, g1, be1 = ln1_ref[0:1, :], ln1_ref[1:2, :], ln1_ref[2:3, :]
    b2, g2, be2, ba = (ln2_ref[0:1, :], ln2_ref[1:2, :],
                       ln2_ref[2:3, :], ln2_ref[3:4, :])

    # fc1 -> LayerNorm -> ReLU
    h1 = jnp.dot(state, w1_ref[...], preferred_element_type=jnp.float32) + b1
    h1 = jnp.maximum(_layernorm(h1, g1, be1), 0.0)

    # fc2 -> LayerNorm
    sv = jnp.dot(h1, w2_ref[...], preferred_element_type=jnp.float32) + b2
    sv = _layernorm(sv, g2, be2)

    # action branch
    av = jnp.dot(action, wa_ref[...], preferred_element_type=jnp.float32) + ba

    # fuse, ReLU
    sa = jnp.maximum(sv + av, 0.0)

    # final q head: VPU multiply + XLU lane reduction instead of an N=1 MXU
    # matmul; bq comes from SMEM as a scalar.
    q = jnp.sum(sa * wq_ref[...], axis=-1, keepdims=True) + bq_ref[0, 0]
    out_ref[...] = q.astype(out_ref.dtype)


def _round_up(x, m):
    return (x + m - 1) // m * m


def critic_forward(state, action, params, *, block_b=None):
    """Whole CriticNetwork forward pass in one fused, batch-tiled Pallas kernel."""
    B, in_dims = state.shape
    n_actions = action.shape[1]
    fc1 = params["w1"].shape[1]
    fc2 = params["w2"].shape[1]

    # Batch tile: multiple of 8 sublanes; cap at 256 for realistic batches so
    # double-buffered activation tiles stay well inside v7x's 64 MiB VMEM.
    if block_b is None:
        block_b = 256 if B >= 256 else _round_up(B, 8)
    b_pad = _round_up(B, block_b)
    if b_pad != B:
        state = jnp.pad(state, ((0, b_pad - B), (0, 0)))
        action = jnp.pad(action, ((0, b_pad - B), (0, 0)))

    # Pack tiny per-feature vectors to shrink the number of DMA'd inputs.
    ln1_pack = jnp.concatenate(
        [params["b1"], params["g1"], params["be1"]], axis=0)                 # (3, fc1)
    ln2_pack = jnp.concatenate(
        [params["b2"], params["g2"], params["be2"], params["ba"]], axis=0)   # (4, fc2)
    wq_row = params["wq"].reshape(1, fc2)                                    # (1, fc2)
    bq = params["bq"].reshape(1, 1)                                          # (1, 1) -> SMEM

    grid = (b_pad // block_b,)

    def resident(shape):
        # Weights/params: same block every grid step -> stay VMEM-resident.
        return pl.BlockSpec(shape, lambda i: (0, 0))

    out = pl.pallas_call(
        critic_kernel,
        out_shape=jax.ShapeDtypeStruct((b_pad, 1), jnp.float32),
        grid=grid,
        in_specs=[
            pl.BlockSpec((block_b, in_dims), lambda i: (i, 0)),      # state tile
            pl.BlockSpec((block_b, n_actions), lambda i: (i, 0)),    # action tile
            resident((in_dims, fc1)),                                # w1
            resident((3, fc1)),                                      # b1/g1/be1
            resident((fc1, fc2)),                                    # w2
            resident((4, fc2)),                                      # b2/g2/be2/ba
            resident((n_actions, fc2)),                              # wa
            resident((1, fc2)),                                      # wq row
            pl.BlockSpec(memory_space=pltpu.MemorySpace.SMEM),       # bq scalar
        ],
        out_specs=pl.BlockSpec((block_b, 1), lambda i: (i, 0)),
        compiler_params=pltpu.CompilerParams(
            dimension_semantics=("parallel",),          # batch tiles -> 2 TCs on v7x
            vmem_limit_bytes=32 * 1024 * 1024,          # explicit budget (v7x-safe)
        ),
    )(state, action, params["w1"], ln1_pack, params["w2"], ln2_pack,
      params["wa"], wq_row, bq)

    return out[:B]


def init_params(key, input_dims, fc1_dims, fc2_dims, n_actions):
    """Deterministic synthetic init mirroring the PyTorch uniform ranges."""
    ks = jax.random.split(key, 8)
    f1 = 1.0 / jnp.sqrt(jnp.float32(fc1_dims))   # 1/sqrt(fc1.weight.size(0))
    f2 = 1.0 / jnp.sqrt(jnp.float32(fc2_dims))   # 1/sqrt(fc2.weight.size(0))
    f3 = 0.003
    f4 = 1.0 / jnp.sqrt(jnp.float32(fc2_dims))   # 1/sqrt(action_value.weight.size(0))
    u = lambda k, shp, lim: jax.random.uniform(k, shp, jnp.float32, -lim, lim)
    return {
        # stored as (in, out) — transposed vs torch's (out, in)
        "w1": u(ks[0], (input_dims, fc1_dims), f1),
        "b1": u(ks[1], (1, fc1_dims), f1),
        "g1": jnp.ones((1, fc1_dims), jnp.float32),
        "be1": jnp.zeros((1, fc1_dims), jnp.float32),
        "w2": u(ks[2], (fc1_dims, fc2_dims), f2),
        "b2": u(ks[3], (1, fc2_dims), f2),
        "g2": jnp.ones((1, fc2_dims), jnp.float32),
        "be2": jnp.zeros((1, fc2_dims), jnp.float32),
        "wa": u(ks[4], (n_actions, fc2_dims), f4),
        "ba": u(ks[5], (1, fc2_dims), f4),
        "wq": u(ks[6], (fc2_dims, 1), f3),
        "bq": u(ks[7], (1, 1), f3),
    }


def critic_forward_ref(state, action, p):
    h1 = state @ p["w1"] + p["b1"]
    h1 = _layernorm(h1, p["g1"], p["be1"])
    h1 = jnp.maximum(h1, 0.0)
    sv = h1 @ p["w2"] + p["b2"]
    sv = _layernorm(sv, p["g2"], p["be2"])
    av = action @ p["wa"] + p["ba"]
    sa = jnp.maximum(sv + av, 0.0)
    return sa @ p["wq"] + p["bq"]


if __name__ == "__main__":
    key = jax.random.PRNGKey(0)
    B, INPUT_DIMS, FC1, FC2, N_ACTIONS = 8, 16, 32, 32, 4

    k_state, k_action, k_params = jax.random.split(key, 3)
    state = jax.random.normal(k_state, (B, INPUT_DIMS), jnp.float32)
    action = jax.random.normal(k_action, (B, N_ACTIONS), jnp.float32)
    params = init_params(k_params, INPUT_DIMS, FC1, FC2, N_ACTIONS)

    out = critic_forward(state, action, params)
    out = jax.block_until_ready(out)
    ref = critic_forward_ref(state, action, params)
    assert out.shape == (B, 1)
    assert jnp.allclose(out, ref, atol=1e-5, rtol=1e-5), (out, ref)

    # exercise the batch-padding path (B not a multiple of the 8-row tile)
    out2 = jax.block_until_ready(critic_forward(state[:5], action[:5], params))
    ref2 = critic_forward_ref(state[:5], action[:5], params)
    assert out2.shape == (5, 1)
    assert jnp.allclose(out2, ref2, atol=1e-5, rtol=1e-5), (out2, ref2)

    print("KERNEL_OK")
</pallas_src>

<mosaic_0001>
module attributes {stable_mosaic.version = 11 : i64} {
  func.func @critic_kernel(%arg0: i32, %arg1: memref<8x16xf32, #tpu.memory_space<vmem>>, %arg2: memref<8x4xf32, #tpu.memory_space<vmem>>, %arg3: memref<16x32xf32, #tpu.memory_space<vmem>>, %arg4: memref<3x32xf32, #tpu.memory_space<vmem>>, %arg5: memref<32x32xf32, #tpu.memory_space<vmem>>, %arg6: memref<4x32xf32, #tpu.memory_space<vmem>>, %arg7: memref<4x32xf32, #tpu.memory_space<vmem>>, %arg8: memref<1x32xf32, #tpu.memory_space<vmem>>, %arg9: memref<1x1xf32, #tpu.memory_space<smem>>, %arg10: memref<8x1xf32, #tpu.memory_space<vmem>>) attributes {dimension_semantics = [#tpu.dimension_semantics<parallel>], iteration_bounds = array<i64: 1>, scalar_prefetch = 0 : i64, scratch_operands = 0 : i64, tpu.core_type = #tpu.core_type<tc>, window_params = [{transform_indices = @transform_0, window_bounds = array<i64: 8, 16>}, {transform_indices = @transform_1, window_bounds = array<i64: 8, 4>}, {pipeline_mode = #tpu.pipeline_mode<synchronous>, transform_indices = @transform_2, window_bounds = array<i64: 16, 32>}, {pipeline_mode = #tpu.pipeline_mode<synchronous>, transform_indices = @transform_3, window_bounds = array<i64: 3, 32>}, {pipeline_mode = #tpu.pipeline_mode<synchronous>, transform_indices = @transform_4, window_bounds = array<i64: 32, 32>}, {pipeline_mode = #tpu.pipeline_mode<synchronous>, transform_indices = @transform_5, window_bounds = array<i64: 4, 32>}, {pipeline_mode = #tpu.pipeline_mode<synchronous>, transform_indices = @transform_6, window_bounds = array<i64: 4, 32>}, {pipeline_mode = #tpu.pipeline_mode<synchronous>, transform_indices = @transform_7, window_bounds = array<i64: 1, 32>}, {transform_indices = @transform_8, window_bounds = array<i64: 1, 1>}, {transform_indices = @transform_9, window_bounds = array<i64: 8, 1>}]} {
    %c0 = arith.constant 0 : index
    %c0_0 = arith.constant 0 : index
    %0 = vector.load %arg1[%c0, %c0_0] : memref<8x16xf32, #tpu.memory_space<vmem>>, vector<8x16xf32>
    %c0_1 = arith.constant 0 : index
    %c0_2 = arith.constant 0 : index
    %1 = vector.load %arg2[%c0_1, %c0_2] : memref<8x4xf32, #tpu.memory_space<vmem>>, vector<8x4xf32>
    %c0_3 = arith.constant 0 : index
    %c0_4 = arith.constant 0 : index
    %2 = vector.load %arg4[%c0_3, %c0_4] : memref<3x32xf32, #tpu.memory_space<vmem>>, vector<1x32xf32>
    %c1 = arith.constant 1 : index
    %c0_5 = arith.constant 0 : index
    %3 = vector.load %arg4[%c1, %c0_5] : memref<3x32xf32, #tpu.memory_space<vmem>>, vector<1x32xf32>
    %c2 = arith.constant 2 : index
    %c0_6 = arith.constant 0 : index
    %4 = vector.load %arg4[%c2, %c0_6] : memref<3x32xf32, #tpu.memory_space<vmem>>, vector<1x32xf32>
    %c0_7 = arith.constant 0 : index
    %c0_8 = arith.constant 0 : index
    %5 = vector.load %arg6[%c0_7, %c0_8] : memref<4x32xf32, #tpu.memory_space<vmem>>, vector<1x32xf32>
    %c1_9 = arith.constant 1 : index
    %c0_10 = arith.constant 0 : index
    %6 = vector.load %arg6[%c1_9, %c0_10] : memref<4x32xf32, #tpu.memory_space<vmem>>, vector<1x32xf32>
    %c2_11 = arith.constant 2 : index
    %c0_12 = arith.constant 0 : index
    %7 = vector.load %arg6[%c2_11, %c0_12] : memref<4x32xf32, #tpu.memory_space<vmem>>, vector<1x32xf32>
    %c3 = arith.constant 3 : index
    %c0_13 = arith.constant 0 : index
    %8 = vector.load %arg6[%c3, %c0_13] : memref<4x32xf32, #tpu.memory_space<vmem>>, vector<1x32xf32>
    %c0_14 = arith.constant 0 : index
    %c0_15 = arith.constant 0 : index
    %9 = vector.load %arg3[%c0_14, %c0_15] : memref<16x32xf32, #tpu.memory_space<vmem>>, vector<16x32xf32>
    %cst = arith.constant dense<0.000000e+00> : vector<8x32xf32>
    %10 = tpu.matmul %0, %9, %cst {dimension_numbers = #tpu.dot_dimension_numbers<[1], [0], [0], [1], [0, 0, 1, 1], [], []>} : vector<8x16xf32>, vector<16x32xf32>, vector<8x32xf32> -> vector<8x32xf32>
    %11 = vector.broadcast %2 : vector<1x32xf32> to vector<8x32xf32>
    %12 = arith.addf %10, %11 : vector<8x32xf32>
    %cst_16 = arith.constant dense<0.000000e+00> : vector<8xf32>
    %13 = vector.multi_reduction <add>, %12, %cst_16 [1] : vector<8x32xf32> to vector<8xf32>
    %14 = vector.shape_cast %13 : vector<8xf32> to vector<8x1xf32>
    %cst_17 = arith.constant 3.200000e+01 : f32
    %15 = vector.broadcast %cst_17 : f32 to vector<8x1xf32>
    %16 = arith.divf %14, %15 : vector<8x1xf32>
    %17 = vector.broadcast %16 : vector<8x1xf32> to vector<8x32xf32>
    %18 = arith.subf %12, %17 : vector<8x32xf32>
    %19 = arith.mulf %18, %18 : vector<8x32xf32>
    %cst_18 = arith.constant dense<0.000000e+00> : vector<8xf32>
    %20 = vector.multi_reduction <add>, %19, %cst_18 [1] : vector<8x32xf32> to vector<8xf32>
    %21 = vector.shape_cast %20 : vector<8xf32> to vector<8x1xf32>
    %cst_19 = arith.constant 3.200000e+01 : f32
    %22 = vector.broadcast %cst_19 : f32 to vector<8x1xf32>
    %23 = arith.divf %21, %22 : vector<8x1xf32>
    %cst_20 = arith.constant 9.99999974E-6 : f32
    %24 = vector.broadcast %cst_20 : f32 to vector<8x1xf32>
    %25 = arith.addf %23, %24 : vector<8x1xf32>
    %26 = math.rsqrt %25 : vector<8x1xf32>
    %27 = vector.broadcast %26 : vector<8x1xf32> to vector<8x32xf32>
    %28 = arith.mulf %18, %27 : vector<8x32xf32>
    %29 = vector.broadcast %3 : vector<1x32xf32> to vector<8x32xf32>
    %30 = arith.mulf %28, %29 : vector<8x32xf32>
    %31 = vector.broadcast %4 : vector<1x32xf32> to vector<8x32xf32>
    %32 = arith.addf %30, %31 : vector<8x32xf32>
    %cst_21 = arith.constant 0.000000e+00 : f32
    %33 = vector.broadcast %cst_21 : f32 to vector<8x32xf32>
    %34 = arith.maximumf %32, %33 : vector<8x32xf32>
    %c0_22 = arith.constant 0 : index
    %c0_23 = arith.constant 0 : index
    %35 = vector.load %arg5[%c0_22, %c0_23] : memref<32x32xf32, #tpu.memory_space<vmem>>, vector<32x32xf32>
    %cst_24 = arith.constant dense<0.000000e+00> : vector<8x32xf32>
    %36 = tpu.matmul %34, %35, %cst_24 {dimension_numbers = #tpu.dot_dimension_numbers<[1], [0], [0], [1], [0, 0, 1, 1], [], []>} : vector<8x32xf32>, vector<32x32xf32>, vector<8x32xf32> -> vector<8x32xf32>
    %37 = vector.broadcast %5 : vector<1x32xf32> to vector<8x32xf32>
    %38 = arith.addf %36, %37 : vector<8x32xf32>
    %cst_25 = arith.constant dense<0.000000e+00> : vector<8xf32>
    %39 = vector.multi_reduction <add>, %38, %cst_25 [1] : vector<8x32xf32> to vector<8xf32>
    %40 = vector.shape_cast %39 : vector<8xf32> to vector<8x1xf32>
    %cst_26 = arith.constant 3.200000e+01 : f32
    %41 = vector.broadcast %cst_26 : f32 to vector<8x1xf32>
    %42 = arith.divf %40, %41 : vector<8x1xf32>
    %43 = vector.broadcast %42 : vector<8x1xf32> to vector<8x32xf32>
    %44 = arith.subf %38, %43 : vector<8x32xf32>
    %45 = arith.mulf %44, %44 : vector<8x32xf32>
    %cst_27 = arith.constant dense<0.000000e+00> : vector<8xf32>
    %46 = vector.multi_reduction <add>, %45, %cst_27 [1] : vector<8x32xf32> to vector<8xf32>
    %47 = vector.shape_cast %46 : vector<8xf32> to vector<8x1xf32>
    %cst_28 = arith.constant 3.200000e+01 : f32
    %48 = vector.broadcast %cst_28 : f32 to vector<8x1xf32>
    %49 = arith.divf %47, %48 : vector<8x1xf32>
    %cst_29 = arith.constant 9.99999974E-6 : f32
    %50 = vector.broadcast %cst_29 : f32 to vector<8x1xf32>
    %51 = arith.addf %49, %50 : vector<8x1xf32>
    %52 = math.rsqrt %51 : vector<8x1xf32>
    %53 = vector.broadcast %52 : vector<8x1xf32> to vector<8x32xf32>
    %54 = arith.mulf %44, %53 : vector<8x32xf32>
    %55 = vector.broadcast %6 : vector<1x32xf32> to vector<8x32xf32>
    %56 = arith.mulf %54, %55 : vector<8x32xf32>
    %57 = vector.broadcast %7 : vector<1x32xf32> to vector<8x32xf32>
    %58 = arith.addf %56, %57 : vector<8x32xf32>
    %c0_30 = arith.constant 0 : index
    %c0_31 = arith.constant 0 : index
    %59 = vector.load %arg7[%c0_30, %c0_31] : memref<4x32xf32, #tpu.memory_space<vmem>>, vector<4x32xf32>
    %cst_32 = arith.constant dense<0.000000e+00> : vector<8x32xf32>
    %60 = tpu.matmul %1, %59, %cst_32 {dimension_numbers = #tpu.dot_dimension_numbers<[1], [0], [0], [1], [0, 0, 1, 1], [], []>} : vector<8x4xf32>, vector<4x32xf32>, vector<8x32xf32> -> vector<8x32xf32>
    %61 = vector.broadcast %8 : vector<1x32xf32> to vector<8x32xf32>
    %62 = arith.addf %60, %61 : vector<8x32xf32>
    %63 = arith.addf %58, %62 : vector<8x32xf32>
    %cst_33 = arith.constant 0.000000e+00 : f32
    %64 = vector.broadcast %cst_33 : f32 to vector<8x32xf32>
    %65 = arith.maximumf %63, %64 : vector<8x32xf32>
    %c0_34 = arith.constant 0 : index
    %c0_35 = arith.constant 0 : index
    %66 = vector.load %arg8[%c0_34, %c0_35] : memref<1x32xf32, #tpu.memory_space<vmem>>, vector<1x32xf32>
    %67 = vector.broadcast %66 : vector<1x32xf32> to vector<8x32xf32>
    %68 = arith.mulf %65, %67 : vector<8x32xf32>
    %cst_36 = arith.constant dense<0.000000e+00> : vector<8xf32>
    %69 = vector.multi_reduction <add>, %68, %cst_36 [1] : vector<8x32xf32> to vector<8xf32>
    %70 = vector.shape_cast %69 : vector<8xf32> to vector<8x1xf32>
    %c0_37 = arith.constant 0 : index
    %c0_38 = arith.constant 0 : index
    %71 = memref.load %arg9[%c0_37, %c0_38] : memref<1x1xf32, #tpu.memory_space<smem>>
    %72 = vector.broadcast %71 : f32 to vector<8x1xf32>
    %73 = arith.addf %70, %72 : vector<8x1xf32>
    %c0_39 = arith.constant 0 : index
    %c0_40 = arith.constant 0 : index
    %74 = vector.load %arg10[%c0_39, %c0_40] : memref<8x1xf32, #tpu.memory_space<vmem>>, vector<8x1xf32>
    tpu.vector_store %arg10[%c0_39, %c0_40], %73 {strides = array<i32>} : memref<8x1xf32, #tpu.memory_space<vmem>>, vector<8x1xf32>,
    return
  }
  func.func @transform_0(%arg0: i32) -> (i32, i32) {
    %c0_i32 = arith.constant 0 : i32
    %c0_i32_0 = arith.constant 0 : i32
    return %arg0, %c0_i32 : i32, i32
  }
  func.func @transform_1(%arg0: i32) -> (i32, i32) {
    %c0_i32 = arith.constant 0 : i32
    %c0_i32_0 = arith.constant 0 : i32
    return %arg0, %c0_i32 : i32, i32
  }
  func.func @transform_2(%arg0: i32) -> (i32, i32) {
    %c0_i32 = arith.constant 0 : i32
    %c0_i32_0 = arith.constant 0 : i32
    %c0_i32_1 = arith.constant 0 : i32
    return %c0_i32, %c0_i32_0 : i32, i32
  }
  func.func @transform_3(%arg0: i32) -> (i32, i32) {
    %c0_i32 = arith.constant 0 : i32
    %c0_i32_0 = arith.constant 0 : i32
    %c0_i32_1 = arith.constant 0 : i32
    return %c0_i32, %c0_i32_0 : i32, i32
  }
  func.func @transform_4(%arg0: i32) -> (i32, i32) {
    %c0_i32 = arith.constant 0 : i32
    %c0_i32_0 = arith.constant 0 : i32
    %c0_i32_1 = arith.constant 0 : i32
    return %c0_i32, %c0_i32_0 : i32, i32
  }
  func.func @transform_5(%arg0: i32) -> (i32, i32) {
    %c0_i32 = arith.constant 0 : i32
    %c0_i32_0 = arith.constant 0 : i32
    %c0_i32_1 = arith.constant 0 : i32
    return %c0_i32, %c0_i32_0 : i32, i32
  }
  func.func @transform_6(%arg0: i32) -> (i32, i32) {
    %c0_i32 = arith.constant 0 : i32
    %c0_i32_0 = arith.constant 0 : i32
    %c0_i32_1 = arith.constant 0 : i32
    return %c0_i32, %c0_i32_0 : i32, i32
  }
  func.func @transform_7(%arg0: i32) -> (i32, i32) {
    %c0_i32 = arith.constant 0 : i32
    %c0_i32_0 = arith.constant 0 : i32
    %c0_i32_1 = arith.constant 0 : i32
    return %c0_i32, %c0_i32_0 : i32, i32
  }
  func.func @transform_8(%arg0: i32) -> (i32, i32) {
    %c0_i32 = arith.constant 0 : i32
    %c0_i32_0 = arith.constant 0 : i32
    %c0_i32_1 = arith.constant 0 : i32
    return %c0_i32, %c0_i32_0 : i32, i32
  }
  func.func @transform_9(%arg0: i32) -> (i32, i32) {
    %c0_i32 = arith.constant 0 : i32
    %c0_i32_0 = arith.constant 0 : i32
    return %arg0, %c0_i32 : i32, i32
  }
}

</mosaic_0001>

<llo_original>
// kernel: tpu_custom_call.1
$region0: #{tpu_custom_call.1}
  #allocation0 [shape = 'u32[]', space=smem, size = 0x4, offset = 0x4, fixed_abs, tag = 'smem constant byte address 0x4 - core index']
  #allocation1 [shape = 'u32[72,128]{1,0:T(1,128)}', space=vmem, size = 0x9000, scoped, tag = 'internal scratch']
  #allocation2 [shape = 'f32[1,1]{1,0:T(1,128)S(6)}', space=smem, size = 0x200, scoped, tag = 'scoped memory for tpu_custom_call.1']
  %s0 = inlined_call_operand.vmem [shape: f32[8,16], index: 0, kind: input, shape index: {}]
  %s1 = inlined_call_operand.vmem [shape: f32[8,4], index: 1, kind: input, shape index: {}]
  %s2 = inlined_call_operand.hbm [shape: f32[16,32], index: 2, kind: input, shape index: {}]
  %s3 = inlined_call_operand.vmem [shape: f32[3,32], index: 3, kind: input, shape index: {}]
  %s4 = inlined_call_operand.hbm [shape: f32[32,32], index: 4, kind: input, shape index: {}]
  %s5 = inlined_call_operand.vmem [shape: f32[4,32], index: 5, kind: input, shape index: {}]
  %s6 = inlined_call_operand.hbm [shape: f32[4,32], index: 6, kind: input, shape index: {}]
  %s7 = inlined_call_operand.vmem [shape: f32[1,32], index: 7, kind: input, shape index: {}]
  %s8 = inlined_call_operand.<no memory space> [shape: f32[1,1], index: 8, kind: input, shape index: {}]
  %s9 = inlined_call_operand.vmem [shape: f32[8,1], index: 9, kind: output, shape index: {}]
  %s10 = sld [smem:[#allocation0]]
  $region58: #{tpu_custom_call.1} parent=0
    _
  %s12 = ssub.s32 1, %s10
  %s13 = scalar_select 0, %s12, %s10
  %14 = sst [smem:[#allocation2]] %s8
  $region1: #{tpu_custom_call.1} parent=0
    #allocation3 [shape = 'u8[8192]{0}', space=vmem, size = 0x2000, scoped, tag = 'input window, operand 2, single buffered']
    #allocation4 [shape = 's32[1]{0}', space=sflag, size = 0x4, scoped, tag = 'scoped memory for tpu_custom_call.1']
    #allocation5 [shape = 'u8[16384]{0}', space=vmem, size = 0x4000, scoped, tag = 'input window, operand 4, single buffered']
    #allocation6 [shape = 's32[1]{0}', space=sflag, size = 0x4, scoped, tag = 'scoped memory for tpu_custom_call.1']
    #allocation7 [shape = 'u8[2048]{0}', space=vmem, size = 0x800, scoped, tag = 'input window, operand 6, single buffered']
    %15 = vsyncpa [#allocation4], 0
    %16 = vsyncpa [#allocation6], 0
    // Predicated region
    $region2: #{tpu_custom_call.1} parent=1 // pred_check
      _
    $region3: #{tpu_custom_call.1} parent=1 // pred_check_branch
      %18 = sbr.rel (0) target = $region5
    $region4: #{tpu_custom_call.1} parent=1 // pred_region
      _
    $region5: #{tpu_custom_call.1} parent=1 // pred_fallthru
      _
    // Predicated region
    $region6: #{tpu_custom_call.1} parent=1 // pred_check
      _
    $region7: #{tpu_custom_call.1} parent=1 // pred_check_branch
      %20 = sbr.rel (0) target = $region9
    $region8: #{tpu_custom_call.1} parent=1 // pred_region
      _
    $region9: #{tpu_custom_call.1} parent=1 // pred_fallthru
      _
    // Predicated region
    $region10: #{tpu_custom_call.1} parent=1 // pred_check
      _
    $region11: #{tpu_custom_call.1} parent=1 // pred_check_branch
      %22 = sbr.rel (0) target = $region13
    $region12: #{tpu_custom_call.1} parent=1 // pred_region
      %24 = vsyncadd [#allocation4], 0
      %s25 = sshll.u32 %s2, 4
      %s26 = int_to_ptr.hbm [resolvable:$true] %s25
      %s27 = sshll.u32 [#allocation3], 4
      %s28 = int_to_ptr.vmem [resolvable:$true] %s27
      %33 = dma.hbm_to_vmem [thread:$0]  %s26, 256, %s28, [#allocation4], 128, 128, 8
    $region13: #{tpu_custom_call.1} parent=1 // pred_fallthru
      _
    // Predicated region
    $region14: #{tpu_custom_call.1} parent=1 // pred_check
      _
    $region15: #{tpu_custom_call.1} parent=1 // pred_check_branch
      %35 = sbr.rel (0) target = $region17
    $region16: #{tpu_custom_call.1} parent=1 // pred_region
      _
    $region17: #{tpu_custom_call.1} parent=1 // pred_fallthru
      _
    // Predicated region
    $region18: #{tpu_custom_call.1} parent=1 // pred_check
      _
    $region19: #{tpu_custom_call.1} parent=1 // pred_check_branch
      %37 = sbr.rel (0) target = $region21
    $region20: #{tpu_custom_call.1} parent=1 // pred_region
      %39 = vsyncadd [#allocation6], 0
      %s40 = sshll.u32 %s4, 4
      %s41 = int_to_ptr.hbm [resolvable:$true] %s40
      %s42 = sshll.u32 [#allocation5], 4
      %s43 = int_to_ptr.vmem [resolvable:$true] %s42
      %48 = dma.hbm_to_vmem [thread:$0]  %s41, 512, %s43, [#allocation6], 128, 128, 8
    $region21: #{tpu_custom_call.1} parent=1 // pred_fallthru
      _
    // Predicated region
    $region22: #{tpu_custom_call.1} parent=1 // pred_check
      _
    $region23: #{tpu_custom_call.1} parent=1 // pred_check_branch
      %50 = sbr.rel (0) target = $region25
    $region24: #{tpu_custom_call.1} parent=1 // pred_region
      _
    $region25: #{tpu_custom_call.1} parent=1 // pred_fallthru
      _
    // Predicated region
    $region26: #{tpu_custom_call.1} parent=1 // pred_check
      _
    $region27: #{tpu_custom_call.1} parent=1 // pred_check_branch
      %52 = sbr.rel (0) target = $region29
    $region28: #{tpu_custom_call.1} parent=1 // pred_region
      %54 = vsyncadd [#allocation6], 0
      %s56 = sshll.u32 %s6, 4
      %s57 = int_to_ptr.hbm [resolvable:$true] %s56
      %s58 = sshll.u32 [#allocation7], 4
      %s59 = int_to_ptr.vmem [resolvable:$true] %s58
      %61 = dma.hbm_to_vmem [thread:$0]  %s57, 64, %s59, [#allocation6]
    $region29: #{tpu_custom_call.1} parent=1 // pred_fallthru
      _
    // Predicated region
    $region30: #{tpu_custom_call.1} parent=1 // pred_check
      _
    $region31: #{tpu_custom_call.1} parent=1 // pred_check_branch
      %63 = sbr.rel (0) target = $region33
    $region32: #{tpu_custom_call.1} parent=1 // pred_region
      _
    $region33: #{tpu_custom_call.1} parent=1 // pred_fallthru
      _
    // Predicated region
    $region34: #{tpu_custom_call.1} parent=1 // pred_check
      _
    $region35: #{tpu_custom_call.1} parent=1 // pred_check_branch
      %65 = sbr.rel (0) target = $region37
    $region36: #{tpu_custom_call.1} parent=1 // pred_region
      _
    $region37: #{tpu_custom_call.1} parent=1 // pred_fallthru
      _
    // Predicated region
    $region38: #{tpu_custom_call.1} parent=1 // pred_check
      _
    $region39: #{tpu_custom_call.1} parent=1 // pred_check_branch
      %67 = sbr.rel (0) target = $region41
    $region40: #{tpu_custom_call.1} parent=1 // pred_region
      %69 = dma.done [#allocation4], 256
    $region41: #{tpu_custom_call.1} parent=1 // pred_fallthru
      _
    // Predicated region
    $region42: #{tpu_custom_call.1} parent=1 // pred_check
      _
    $region43: #{tpu_custom_call.1} parent=1 // pred_check_branch
      %71 = sbr.rel (0) target = $region45
    $region44: #{tpu_custom_call.1} parent=1 // pred_region
      %73 = dma.done [#allocation6], 512
    $region45: #{tpu_custom_call.1} parent=1 // pred_fallthru
      _
    // Predicated region
    $region46: #{tpu_custom_call.1} parent=1 // pred_check
      _
    $region47: #{tpu_custom_call.1} parent=1 // pred_check_branch
      %75 = sbr.rel (0) target = $region49
    $region48: #{tpu_custom_call.1} parent=1 // pred_region
      %77 = dma.done [#allocation6], 64
    $region49: #{tpu_custom_call.1} parent=1 // pred_fallthru
      _
    %v78 = vld [vmem:[%s0] sm:$0xff]
    %v79 = vld [vmem:[%s1] sm:$0xff]
    %v80 = vld [vmem:[%s3] sm:$0x1]
    %v81 = vld [vmem:[%s3 + $0x1] sm:$0x1]
    %v82 = vld [vmem:[%s3 + $0x2] sm:$0x1]
    %v83 = vld [vmem:[%s5] sm:$0x1]
    %v84 = vld [vmem:[%s5 + $0x1] sm:$0x1]
    %v85 = vld [vmem:[%s5 + $0x2] sm:$0x1]
    %v86 = vld [vmem:[%s5 + $0x3] sm:$0x1]
    %v87 = vld [vmem:[#allocation3] sm:$0xff]
    %v88 = vld [vmem:[#allocation3 + $0x8] sm:$0xff]
    %v89 = vperm.slane %v80, 0
    %vm90 = vcmask 130048
    %v92 = vsel %vm90, %v78, 0
    %94 = vmatpush.msra.mxu0 0.0
    %95 = vmatpush.msra.mxu0 0.0
    %96 = vmatpush.msra.mxu0 0.0
    %97 = vmatpush.msra.mxu0 0.0
    %98 = vmatpush.msra.mxu0 0.0
    %99 = vmatpush.msra.mxu0 0.0
    %100 = vmatpush.msra.mxu0 0.0
    %101 = vmatpush.msra.mxu0 0.0
    %102 = vmatpush.msra.mxu0 0.0
    %103 = vmatpush.msra.mxu0 0.0
    %104 = vmatpush.msra.mxu0 0.0
    %105 = vmatpush.msra.mxu0 0.0
    %106 = vmatpush.msra.mxu0 0.0
    %107 = vmatpush.msra.mxu0 0.0
    %108 = vmatpush.msra.mxu0 %v88
    %109 = vmatpush.msra.mxu0 %v87
    %110 = vmatmul.f32.gmra.mxu0 %v92
    %v111 = vpop.f32.mrf.mxu0
    %v112 = vadd.f32 %v89, %v111
    %113 = vdwg.mxu0
    %vm114 = vcmask 261120
    %v115 = vsel %vm114, %v112, 0.0
    %116 = vadd.xlane.f32.xlu0 %v115
    %v117 = vpop.xlane.xlu0 %116
    %v118 = vrcp.pop 32.0
    %v119 = vmul.f32 32.0, %v118
    %v120 = vsub.f32 1.0, %v119
    %v121 = vmul.f32 %v118, %v120
    %v122 = vadd.f32 %v118, %v121
    %vm123 = vweird.f32 %v118
    %v124 = vsel %vm123, %v118, %v122
    %v125 = vmul.f32 %v117, %v124
    %v126 = vsub.f32 %v112, %v125
    %v127 = vmul.f32 %v126, %v126
    %v128 = vsel %vm114, %v127, 0.0
    %129 = vadd.xlane.f32.xlu0 %v128
    %v130 = vpop.xlane.xlu0 %129
    %v131 = vmul.f32 %v130, %v124
    %v132 = vadd.f32 %v131, 1e-05
    %v133 = vrsqrt.pop %v132
    %v134 = vmul.f32 %v133, %v132
    %v135 = vmul.f32 %v134, %v133
    %v136 = vmul.f32 0.5, %v135
    %v137 = vsub.f32 1.5, %v136
    %v138 = vmul.f32 %v133, %v137
    %vm139 = vweird.f32 %v132
    %vm140 = vweird.f32 %v133
    %vm141 = vmor %vm139, %vm140
    %v142 = vsel %vm141, %v133, %v138
    %v143 = vmul.f32 %v126, %v142
    %v144 = vperm.slane %v81, 0
    %v145 = vmul.f32 %v143, %v144
    %v146 = vperm.slane %v82, 0
    %v147 = vadd.f32 %v145, %v146
    %v148 = vmax.f32 %v147, 0.0
    %v149 = vld [vmem:[#allocation5] sm:$0xff]
    %v150 = vld [vmem:[#allocation5 + $0x8] sm:$0xff]
    %v151 = vld [vmem:[#allocation5 + $0x10] sm:$0xff]
    %v152 = vld [vmem:[#allocation5 + $0x18] sm:$0xff]
    %v153 = vperm.slane %v83, 0
    %v155 = vsel %vm114, %v148, 0
    %157 = vmatpush.msra.mxu0 0.0
    %158 = vmatpush.msra.mxu0 0.0
    %159 = vmatpush.msra.mxu0 0.0
    %160 = vmatpush.msra.mxu0 0.0
    %161 = vmatpush.msra.mxu0 0.0
    %162 = vmatpush.msra.mxu0 0.0
    %163 = vmatpush.msra.mxu0 0.0
    %164 = vmatpush.msra.mxu0 0.0
    %165 = vmatpush.msra.mxu0 0.0
    %166 = vmatpush.msra.mxu0 0.0
    %167 = vmatpush.msra.mxu0 0.0
    %168 = vmatpush.msra.mxu0 0.0
    %169 = vmatpush.msra.mxu0 %v152
    %170 = vmatpush.msra.mxu0 %v151
    %171 = vmatpush.msra.mxu0 %v150
    %172 = vmatpush.msra.mxu0 %v149
    %173 = vmatmul.f32.gmra.mxu0 %v155
    %v174 = vpop.f32.mrf.mxu0
    %v175 = vadd.f32 %v153, %v174
    %176 = vdwg.mxu0
    %v177 = vsel %vm114, %v175, 0.0
    %178 = vadd.xlane.f32.xlu0 %v177
    %v179 = vpop.xlane.xlu0 %178
    %v180 = vmul.f32 %v179, %v124
    %v181 = vsub.f32 %v175, %v180
    %v182 = vmul.f32 %v181, %v181
    %v183 = vsel %vm114, %v182, 0.0
    %184 = vadd.xlane.f32.xlu0 %v183
    %v185 = vpop.xlane.xlu0 %184
    %v186 = vmul.f32 %v185, %v124
    %v187 = vadd.f32 %v186, 1e-05
    %v188 = vrsqrt.pop %v187
    %v189 = vmul.f32 %v188, %v187
    %v190 = vmul.f32 %v189, %v188
    %v191 = vmul.f32 0.5, %v190
    %v192 = vsub.f32 1.5, %v191
    %v193 = vmul.f32 %v188, %v192
    %vm194 = vweird.f32 %v187
    %vm195 = vweird.f32 %v188
    %vm196 = vmor %vm194, %vm195
    %v197 = vsel %vm196, %v188, %v193
    %v198 = vmul.f32 %v181, %v197
    %v199 = vperm.slane %v84, 0
    %v200 = vmul.f32 %v198, %v199
    %v201 = vperm.slane %v85, 0
    %v202 = vadd.f32 %v200, %v201
    %v203 = vld [vmem:[#allocation7] sm:$0xf]
    %v204 = vperm.slane %v86, 0
    %vm205 = vcmask 31744
    %v207 = vsel %vm205, %v79, 0
    %vm209 = vcmask 1043456
    %v211 = vsel %vm209, %v203, 0
    %213 = vmatpush.msra.mxu0 0.0
    %214 = vmatpush.msra.mxu0 0.0
    %215 = vmatpush.msra.mxu0 0.0
    %216 = vmatpush.msra.mxu0 0.0
    %217 = vmatpush.msra.mxu0 0.0
    %218 = vmatpush.msra.mxu0 0.0
    %219 = vmatpush.msra.mxu0 0.0
    %220 = vmatpush.msra.mxu0 0.0
    %221 = vmatpush.msra.mxu0 0.0
    %222 = vmatpush.msra.mxu0 0.0
    %223 = vmatpush.msra.mxu0 0.0
    %224 = vmatpush.msra.mxu0 0.0
    %225 = vmatpush.msra.mxu0 0.0
    %226 = vmatpush.msra.mxu0 0.0
    %227 = vmatpush.msra.mxu0 0.0
    %228 = vmatpush.msra.mxu0 %v211
    %229 = vmatmul.f32.gmra.mxu0 %v207
    %v230 = vpop.f32.mrf.mxu0
    %v231 = vadd.f32 %v204, %v230
    %232 = vdwg.mxu0
    %v233 = vadd.f32 %v202, %v231
    %v234 = vmax.f32 %v233, 0.0
    %v235 = vld [vmem:[%s7] sm:$0x1]
    %v237 = vperm.slane %v235, 0
    %v239 = vmul.f32 %v234, %v237
    %v240 = vsel %vm114, %v239, 0.0
    %241 = vadd.xlane.f32.xlu0 %v240
    %v242 = vpop.xlane.xlu0 %241
    %s243 = sld [smem:[#allocation2]]
    %v244 = vstv %s243
    %v245 = vadd.f32 %v242, %v244
    %vm246 = vcmask 7168
    %247 = vst.msk [vmem:[%s9] sm:$0xff] %vm246, %v245
    // Predicated region
    $region50: #{tpu_custom_call.1} parent=1 // pred_check
      _
    $region51: #{tpu_custom_call.1} parent=1 // pred_check_branch
      %249 = sbr.rel (0) target = $region53
    $region52: #{tpu_custom_call.1} parent=1 // pred_region
      _
    $region53: #{tpu_custom_call.1} parent=1 // pred_fallthru
      _
    // Predicated region
    $region54: #{tpu_custom_call.1} parent=1 // pred_check
      _
    $region55: #{tpu_custom_call.1} parent=1 // pred_check_branch
      %251 = sbr.rel (0) target = $region57
    $region56: #{tpu_custom_call.1} parent=1 // pred_region
      _
    $region57: #{tpu_custom_call.1} parent=1 // pred_fallthru
      _
    %252 = vsyncpa [#allocation4], 1
    %253 = vsyncpa [#allocation6], 1

</llo_original>
